<compile_context>
chip_gen: v7x
topology: tpu7x:2x2x1
jax: 0.10.0
libtpu: 0.0.40
codegen_flags: <defaults>
</compile_context>

<pallas_src>
import functools

import jax
import jax.numpy as jnp
from jax import lax
from jax.experimental import pallas as pl
from jax.experimental.pallas import tpu as pltpu


def _tens_linear_block_weight(w, scale):
    """(V, 2) TensLinear weight -> (6, 3V) block weight with `scale` folded in.

    Wbig[c*3 + k, v*3 + k'] = scale * w[v, c] * I3[k, k'] so that
    Y[r, v*3 + k] = scale * sum_c w[v, c] * X[r, c*3 + k] for rows X holding the
    two 3-vector channels side by side.
    """
    V = w.shape[0]
    i3 = jnp.eye(3, dtype=w.dtype)
    wb = w.T[:, None, :, None] * i3[None, :, None, :]          # (2, 3, V, 3)
    return (scale * wb).reshape(6, 3 * V)


def _pick_batch_tile(batch, nodes, target_rows, sublane=8):
    """Batch elements per grid step.

    Pick the largest divisor of `batch` whose row block (bt * nodes) is
    sublane-aligned and <= target_rows. If nothing fits, take the SMALLEST
    aligned tile (never the full batch) so the double-buffered block cannot
    blow past scoped/physical VMEM (v7x: 64 MiB). For large problems, keep at
    least 2 grid steps so the single "parallel" axis shards across v7x's two
    TensorCores (no-op on v5e/v6e).
    """
    valid = [bt for bt in range(1, batch + 1)
             if batch % bt == 0 and ((bt * nodes) % sublane == 0 or bt == batch)]
    fitting = [bt for bt in valid if bt * nodes <= target_rows]
    if fitting:
        bt = max(fitting)
    else:
        bt = min(valid)
    if bt == batch and batch > 1 and batch * nodes > 4096:
        smaller = [c for c in valid if c < batch]
        if smaller:
            bt = max(smaller)
    # TODO(synk): if batch has no divisor bt < batch with bt*nodes % 8 == 0 and
    # B*N is huge, a node-axis split (with per-sub-block masks) would be needed
    # to stay inside VMEM; not required for the shapes this module sees.
    return bt


def _neighbour_disp_kernel(p0_ref, p1_ref, w_ref, out_ref, *, nodes):
    """One grid step == rows // nodes whole chains.

    p0_ref  : (rows, 3)    pos_0 rows, rows = Bt*nodes
    p1_ref  : (rows, 3)    pos_1 rows
    w_ref   : (12, 3V)     stacked [lin_l; lin_r] block weights (0.1 folded in)
    out_ref : (rows, 3V)
    """
    rows = p0_ref.shape[0]
    p = jnp.concatenate([p0_ref[...], p1_ref[...]], axis=-1)        # (rows, 6)

    # Chain-position column, computed once and broadcast in the masks.
    node = lax.broadcasted_iota(jnp.int32, (rows, 1), 0) % nodes

    # Forward difference along the chain: dl[r] = p[r+1] - p[r], zeroed at the
    # last node of every chain (also kills the roll wrap-around and any
    # cross-chain leakage inside a multi-batch block).
    dl = pltpu.roll(p, shift=rows - 1, axis=0) - p                   # == roll(p, -1)
    dl = jnp.where(node == nodes - 1, 0.0, dl)

    # delta_r is delta_l shifted one node towards higher indices with a zero at
    # node 0 of every chain; build it on the input side (6 lanes) so the two
    # linears fuse into a single K=12 matmul and the epilogue is a plain store.
    dr = pltpu.roll(dl, shift=1, axis=0)
    dr = jnp.where(node == 0, 0.0, dr)

    x = jnp.concatenate([dl, dr], axis=-1)                           # (rows, 12)
    out_ref[...] = jnp.dot(
        x, w_ref[...], preferred_element_type=jnp.float32
    ).astype(out_ref.dtype)


def neighbour_disp_embed(pos_0, pos_1, w_l, w_r, *, target_rows=8192,
                         out_dtype=None):
    """pos_0, pos_1: (B, N, 3); w_l, w_r: (dim_v, 2). Returns (B, N, dim_v, 3).

    out_dtype=jnp.bfloat16 nearly halves the dominant HBM write stream on this
    write-bound kernel if the consumer tolerates it (f32 by default).
    """
    B, N, _ = pos_0.shape
    V = w_l.shape[0]
    out_dtype = pos_0.dtype if out_dtype is None else out_dtype

    # Contiguous reshapes (no HBM copy); weights stacked with 0.1 folded in.
    p0 = pos_0.reshape(B * N, 3)
    p1 = pos_1.reshape(B * N, 3)
    w = jnp.concatenate(
        [_tens_linear_block_weight(w_l, 0.1),
         _tens_linear_block_weight(w_r, 0.1)], axis=0)               # (12, 3V)

    bt = _pick_batch_tile(B, N, target_rows)
    rows = bt * N
    grid = (B // bt,)

    # VMEM estimate (double-buffered inputs + output + resident weight); only
    # raise the scoped limit when the block actually needs it (v5e default is
    # 16 MiB), and never ask for more than fits v7x's 64 MiB physical VMEM.
    in_bytes = jnp.dtype(pos_0.dtype).itemsize
    out_bytes = jnp.dtype(out_dtype).itemsize
    est = 2 * rows * (2 * 3 * in_bytes + 3 * V * out_bytes) + 12 * 3 * V * 4
    vmem_limit = None
    if est > 12 * 1024 * 1024:
        vmem_limit = min(int(est * 1.5) + (2 << 20), 56 * 1024 * 1024)

    kernel = functools.partial(_neighbour_disp_kernel, nodes=N)

    out_flat = pl.pallas_call(
        kernel,
        out_shape=jax.ShapeDtypeStruct((B * N, 3 * V), out_dtype),
        grid=grid,
        in_specs=[
            pl.BlockSpec((rows, 3), lambda i: (i, 0)),
            pl.BlockSpec((rows, 3), lambda i: (i, 0)),
            pl.BlockSpec((12, 3 * V), lambda i: (0, 0)),   # weight stays resident
        ],
        out_specs=pl.BlockSpec((rows, 3 * V), lambda i: (i, 0)),
        compiler_params=pltpu.CompilerParams(
            dimension_semantics=("parallel",),
            vmem_limit_bytes=vmem_limit,
        ),
    )(p0, p1, w)

    # Deliberately NOT padding the 96-lane output to 128 lanes: +33% write
    # bytes on a write-bound kernel is a regression unless the consumer reads
    # the padded slab in place.
    return out_flat.reshape(B, N, V, 3)


def neighbour_disp_embed_ref(pos_0, pos_1, w_l, w_r):
    """Pure-JAX reference mirroring the PyTorch forward."""
    d = jnp.stack(
        [pos_0[:, 1:] - pos_0[:, :-1], pos_1[:, 1:] - pos_1[:, :-1]], axis=2
    )  # (B, N-1, 2, 3)
    delta_l = jnp.pad(d, ((0, 0), (0, 1), (0, 0), (0, 0)))
    delta_r = jnp.pad(d, ((0, 0), (1, 0), (0, 0), (0, 0)))
    lin = lambda w, x: jnp.einsum("vc,bnck->bnvk", w, x)
    return 0.1 * (lin(w_l, delta_l) + lin(w_r, delta_r))


if __name__ == "__main__":
    B, N, dim_v = 2, 8, 32

    key = jax.random.PRNGKey(0)
    k0, k1, k2, k3 = jax.random.split(key, 4)
    pos_0 = jax.random.normal(k0, (B, N, 3), dtype=jnp.float32)
    pos_1 = jax.random.normal(k1, (B, N, 3), dtype=jnp.float32)
    # Deterministic synthetic weights for TensLinear(1, 2, dim_v) (bias-free).
    w_l = jax.random.normal(k2, (dim_v, 2), dtype=jnp.float32) * 0.5
    w_r = jax.random.normal(k3, (dim_v, 2), dtype=jnp.float32) * 0.5

    out = jax.block_until_ready(neighbour_disp_embed(pos_0, pos_1, w_l, w_r))
    ref = neighbour_disp_embed_ref(pos_0, pos_1, w_l, w_r)

    assert out.shape == (B, N, dim_v, 3), out.shape
    assert jnp.allclose(out, ref, atol=1e-5, rtol=1e-5), float(
        jnp.max(jnp.abs(out - ref))
    )
    print("KERNEL_OK")
</pallas_src>

<mosaic_0001>
module attributes {stable_mosaic.version = 11 : i64} {
  func.func @_neighbour_disp_kernel(%arg0: i32, %arg1: memref<16x3xf32, #tpu.memory_space<vmem>>, %arg2: memref<16x3xf32, #tpu.memory_space<vmem>>, %arg3: memref<12x96xf32, #tpu.memory_space<vmem>>, %arg4: memref<16x96xf32, #tpu.memory_space<vmem>>) attributes {dimension_semantics = [#tpu.dimension_semantics<parallel>], iteration_bounds = array<i64: 1>, scalar_prefetch = 0 : i64, scratch_operands = 0 : i64, tpu.core_type = #tpu.core_type<tc>, window_params = [{transform_indices = @transform_0, window_bounds = array<i64: 16, 3>}, {transform_indices = @transform_1, window_bounds = array<i64: 16, 3>}, {pipeline_mode = #tpu.pipeline_mode<synchronous>, transform_indices = @transform_2, window_bounds = array<i64: 12, 96>}, {transform_indices = @transform_3, window_bounds = array<i64: 16, 96>}]} {
    %c0 = arith.constant 0 : index
    %c0_0 = arith.constant 0 : index
    %0 = vector.load %arg1[%c0, %c0_0] : memref<16x3xf32, #tpu.memory_space<vmem>>, vector<16x3xf32>
    %c0_1 = arith.constant 0 : index
    %c0_2 = arith.constant 0 : index
    %1 = vector.load %arg2[%c0_1, %c0_2] : memref<16x3xf32, #tpu.memory_space<vmem>>, vector<16x3xf32>
    %2 = tpu.concatenate %0, %1 in 1 : vector<16x3xf32>, vector<16x3xf32> -> vector<16x6xf32>
    %3 = tpu.iota {dimensions = array<i32: 0>} : vector<16x1xi32>
    %c8_i32 = arith.constant 8 : i32
    %c0_i32 = arith.constant 0 : i32
    %4 = arith.cmpi eq, %c8_i32, %c0_i32 : i32
    %c1_i32 = arith.constant 1 : i32
    %5 = arith.select %4, %c1_i32, %c8_i32 : i32
    %6 = vector.broadcast %5 : i32 to vector<16x1xi32>
    %7 = arith.remsi %3, %6 : vector<16x1xi32>
    %c0_i32_3 = arith.constant 0 : i32
    %8 = vector.broadcast %c0_i32_3 : i32 to vector<16x1xi32>
    %9 = arith.cmpi ne, %7, %8 : vector<16x1xi32>
    %c0_i32_4 = arith.constant 0 : i32
    %10 = vector.broadcast %c0_i32_4 : i32 to vector<16x1xi32>
    %11 = arith.cmpi slt, %7, %10 : vector<16x1xi32>
    %c0_i32_5 = arith.constant 0 : i32
    %12 = arith.cmpi slt, %5, %c0_i32_5 : i32
    %13 = vector.broadcast %12 : i1 to vector<16x1xi1>
    %14 = vector.broadcast %13 : vector<16x1xi1> to vector<16x1xi1>
    %15 = arith.xori %11, %14 : vector<16x1xi1>
    %16 = arith.andi %15, %9 : vector<16x1xi1>
    %17 = vector.broadcast %5 : i32 to vector<16x1xi32>
    %18 = arith.addi %7, %17 : vector<16x1xi32>
    %19 = arith.select %16, %18, %7 : vector<16x1xi1>, vector<16x1xi32>
    %c15_i32 = arith.constant 15 : i32
    %20 = tpu.dynamic_rotate %2 by %c15_i32 dim 0 : vector<16x6xf32>, i32 -> vector<16x6xf32>
    %21 = arith.subf %20, %2 : vector<16x6xf32>
    %c7_i32 = arith.constant 7 : i32
    %22 = vector.broadcast %c7_i32 : i32 to vector<16x1xi32>
    %23 = arith.cmpi eq, %19, %22 : vector<16x1xi32>
    %cst = arith.constant 0.000000e+00 : f32
    %24 = vector.shape_cast %23 : vector<16x1xi1> to vector<16x1xi1>
    %25 = vector.broadcast %24 : vector<16x1xi1> to vector<16x6xi1>
    %26 = vector.broadcast %cst : f32 to vector<16x6xf32>
    %27 = arith.select %25, %26, %21 : vector<16x6xi1>, vector<16x6xf32>
    %c1_i32_6 = arith.constant 1 : i32
    %28 = tpu.dynamic_rotate %27 by %c1_i32_6 dim 0 : vector<16x6xf32>, i32 -> vector<16x6xf32>
    %c0_i32_7 = arith.constant 0 : i32
    %29 = vector.broadcast %c0_i32_7 : i32 to vector<16x1xi32>
    %30 = arith.cmpi eq, %19, %29 : vector<16x1xi32>
    %cst_8 = arith.constant 0.000000e+00 : f32
    %31 = vector.shape_cast %30 : vector<16x1xi1> to vector<16x1xi1>
    %32 = vector.broadcast %31 : vector<16x1xi1> to vector<16x6xi1>
    %33 = vector.broadcast %cst_8 : f32 to vector<16x6xf32>
    %34 = arith.select %32, %33, %28 : vector<16x6xi1>, vector<16x6xf32>
    %35 = tpu.concatenate %27, %34 in 1 : vector<16x6xf32>, vector<16x6xf32> -> vector<16x12xf32>
    %c0_9 = arith.constant 0 : index
    %c0_10 = arith.constant 0 : index
    %36 = vector.load %arg3[%c0_9, %c0_10] : memref<12x96xf32, #tpu.memory_space<vmem>>, vector<12x96xf32>
    %cst_11 = arith.constant dense<0.000000e+00> : vector<16x96xf32>
    %37 = tpu.matmul %35, %36, %cst_11 {dimension_numbers = #tpu.dot_dimension_numbers<[1], [0], [0], [1], [0, 0, 1, 1], [], []>} : vector<16x12xf32>, vector<12x96xf32>, vector<16x96xf32> -> vector<16x96xf32>
    %c0_12 = arith.constant 0 : index
    %c0_13 = arith.constant 0 : index
    %38 = vector.load %arg4[%c0_12, %c0_13] : memref<16x96xf32, #tpu.memory_space<vmem>>, vector<16x96xf32>
    tpu.vector_store %arg4[%c0_12, %c0_13], %37 {strides = array<i32>} : memref<16x96xf32, #tpu.memory_space<vmem>>, vector<16x96xf32>,
    return
  }
  func.func @transform_0(%arg0: i32) -> (i32, i32) {
    %c0_i32 = arith.constant 0 : i32
    %c0_i32_0 = arith.constant 0 : i32
    return %arg0, %c0_i32 : i32, i32
  }
  func.func @transform_1(%arg0: i32) -> (i32, i32) {
    %c0_i32 = arith.constant 0 : i32
    %c0_i32_0 = arith.constant 0 : i32
    return %arg0, %c0_i32 : i32, i32
  }
  func.func @transform_2(%arg0: i32) -> (i32, i32) {
    %c0_i32 = arith.constant 0 : i32
    %c0_i32_0 = arith.constant 0 : i32
    %c0_i32_1 = arith.constant 0 : i32
    return %c0_i32, %c0_i32_0 : i32, i32
  }
  func.func @transform_3(%arg0: i32) -> (i32, i32) {
    %c0_i32 = arith.constant 0 : i32
    %c0_i32_0 = arith.constant 0 : i32
    return %arg0, %c0_i32 : i32, i32
  }
}

</mosaic_0001>

<llo_original>
// kernel: tpu_custom_call.1
$region0: #{tpu_custom_call.1}
  #allocation0 [shape = 'u32[]', space=smem, size = 0x4, offset = 0x4, fixed_abs, tag = 'smem constant byte address 0x4 - core index']
  #allocation1 [shape = 'u32[144,128]{1,0:T(1,128)}', space=vmem, size = 0x12000, scoped, tag = 'internal scratch']
  %s0 = inlined_call_operand.vmem [shape: f32[16,3], index: 0, kind: input, shape index: {}]
  %s1 = inlined_call_operand.vmem [shape: f32[16,3], index: 1, kind: input, shape index: {}]
  %s2 = inlined_call_operand.vmem [shape: f32[12,96], index: 2, kind: input, shape index: {}]
  %s3 = inlined_call_operand.hbm [shape: f32[16,96], index: 3, kind: output, shape index: {}]
  %s4 = sld [smem:[#allocation0]]
  $region22: #{tpu_custom_call.1} parent=0
    _
  %s6 = ssub.s32 1, %s4
  %s7 = scalar_select 0, %s6, %s4
  $region1: #{tpu_custom_call.1} parent=0
    #allocation2 [shape = 'u8[8192]{0}', space=vmem, size = 0x2000, scoped, tag = 'output window, operand 0, single buffered']
    #allocation3 [shape = 's32[1]{0}', space=sflag, size = 0x4, scoped, tag = 'scoped memory for tpu_custom_call.1']
    %8 = vsyncpa [#allocation3], 0
    // Predicated region
    $region2: #{tpu_custom_call.1} parent=1 // pred_check
      _
    $region3: #{tpu_custom_call.1} parent=1 // pred_check_branch
      %10 = sbr.rel (0) target = $region5
    $region4: #{tpu_custom_call.1} parent=1 // pred_region
      _
    $region5: #{tpu_custom_call.1} parent=1 // pred_fallthru
      _
    // Predicated region
    $region6: #{tpu_custom_call.1} parent=1 // pred_check
      _
    $region7: #{tpu_custom_call.1} parent=1 // pred_check_branch
      %12 = sbr.rel (0) target = $region9
    $region8: #{tpu_custom_call.1} parent=1 // pred_region
      _
    $region9: #{tpu_custom_call.1} parent=1 // pred_fallthru
      _
    // Predicated region
    $region10: #{tpu_custom_call.1} parent=1 // pred_check
      _
    $region11: #{tpu_custom_call.1} parent=1 // pred_check_branch
      %14 = sbr.rel (0) target = $region13
    $region12: #{tpu_custom_call.1} parent=1 // pred_region
      _
    $region13: #{tpu_custom_call.1} parent=1 // pred_fallthru
      _
    %v15 = vld [vmem:[%s0] sm:$0xff]
    %v16 = vld [vmem:[%s0 + $0x8] sm:$0xff]
    %v17 = vld [vmem:[%s1] sm:$0xff]
    %v18 = vld [vmem:[%s1 + $0x8] sm:$0xff]
    %21 = vrot.lane.b32.xlu0 %v17, 3
    %v22 = vpop.permute.xlu0 %21
    %23 = vrot.lane.b32.xlu0 %v18, 3
    %v24 = vpop.permute.xlu0 %23
    %vm27 = vcmask 23552
    %v28 = vsel %vm27, %v15, %v22
    %v29 = vsel %vm27, %v16, %v24
    %v30 = vlaneseq
    %v31 = vshrl.u32 %v30, 7
    %v32 = vadd.s32 %v31, 8
    %vm33 = vcmp.lt.s32.totalorder %v31, 0
    %v34 = vsub.s32 0, %v31
    %v35 = vsel %vm33, %v34, %v31
    %v36 = vshrl.u32 %v35, 3
    %v37 = vand.u32 %v35, 7
    %v38 = vsub.s32 0, %v37
    %v39 = vsel %vm33, %v38, %v37
    %vm40 = vcmp.lt.s32.totalorder %v32, 0
    %v41 = vsub.s32 0, %v32
    %v42 = vsel %vm40, %v41, %v32
    %v43 = vshrl.u32 %v42, 3
    %v44 = vand.u32 %v42, 7
    %v45 = vsub.s32 0, %v44
    %v46 = vsel %vm40, %v45, %v44
    %vm47 = vcmp.ne.s32.totalorder %v39, 0
    %vm48 = vcmp.ne.s32.totalorder %v46, 0
    %vm49 = vcmp.lt.s32.totalorder %v39, 0
    %vm50 = vcmp.lt.s32.totalorder %v46, 0
    %vm51 = vmand %vm49, %vm47
    %vm52 = vmand %vm50, %vm48
    %v53 = vadd.s32 %v39, 8
    %v54 = vadd.s32 %v46, 8
    %v55 = vsel %vm51, %v53, %v39
    %v56 = vsel %vm52, %v54, %v46
    %v57 = vrot.slane %v28, 1
    %v58 = vrot.slane %v29, 1
    %vm59 = vcmp.lt.s32.totalorder %v31, 7
    %v60 = vsel %vm59, %v57, %v58
    %v61 = vsel %vm59, %v58, %v57
    %v62 = vsub.f32 %v60, %v28
    %v63 = vsub.f32 %v61, %v29
    %vm64 = vcmp.eq.s32.totalorder %v55, 7
    %vm65 = vcmp.eq.s32.totalorder %v56, 7
    %v66 = vsel %vm64, 1, 0
    %v67 = vsel %vm65, 1, 0
    %vm68 = vcmp.eq.s32.totalorder %v66, 1
    %vm69 = vcmp.eq.s32.totalorder %v67, 1
    %v70 = vsel %vm68, 0.0, %v62
    %v71 = vsel %vm69, 0.0, %v63
    %v72 = vrot.slane %v70, 7
    %v73 = vrot.slane %v71, 7
    %vm74 = vcmp.lt.s32.totalorder %v31, 1
    %v75 = vsel %vm74, %v72, %v73
    %v76 = vsel %vm74, %v73, %v72
    %vm77 = vcmp.eq.s32.totalorder %v55, 0
    %vm78 = vcmp.eq.s32.totalorder %v56, 0
    %v79 = vsel %vm77, 1, 0
    %v80 = vsel %vm78, 1, 0
    %vm81 = vcmp.eq.s32.totalorder %v79, 1
    %vm82 = vcmp.eq.s32.totalorder %v80, 1
    %v83 = vsel %vm81, 0.0, %v76
    %v84 = vsel %vm82, 0.0, %v75
    %87 = vrot.lane.b32.xlu0 %v83, 6
    %v88 = vpop.permute.xlu0 %87
    %89 = vrot.lane.b32.xlu0 %v84, 6
    %v90 = vpop.permute.xlu0 %89
    %vm93 = vcmask 48128
    %v94 = vsel %vm93, %v70, %v88
    %v95 = vsel %vm93, %v71, %v90
    %v96 = vld [vmem:[%s2] sm:$0xff]
    %v97 = vld [vmem:[%s2 + $0x8] sm:$0xf]
    %vm98 = vcmask 97280
    %v100 = vsel %vm98, %v94, 0
    %v103 = vsel %vm98, %v95, 0
    %vm105 = vcmask 1043456
    %v107 = vsel %vm105, %v97, 0
    %109 = vmatprep.subr.mxu0 0.0
    %110 = vmatpush1.msra.mxu0 %v96
    %111 = vmatprep.subr.mxu0 0.0
    %112 = vmatpush1.msra.mxu0 %v107
    %113 = vmatprep.subr.mxu0 0.0
    %114 = vmatpush1.msra.mxu0 0.0
    %115 = vmatprep.subr.mxu0 0.0
    %116 = vmatpush1.msra.mxu0 0.0
    %117 = vmatprep.subr.mxu0 0.0
    %118 = vmatpush1.msra.mxu0 0.0
    %119 = vmatprep.subr.mxu0 0.0
    %120 = vmatpush1.msra.mxu0 0.0
    %121 = vmatprep.subr.mxu0 0.0
    %122 = vmatpush1.msra.mxu0 0.0
    %123 = vmatprep.subr.mxu0 0.0
    %124 = vmatpush1.msra.mxu0 0.0
    %125 = vmatprep.subr.mxu0 0.0
    %126 = vmatpush1.msra.mxu0 0.0
    %127 = vmatprep.subr.mxu0 0.0
    %128 = vmatpush1.msra.mxu0 0.0
    %129 = vmatprep.subr.mxu0 0.0
    %130 = vmatpush1.msra.mxu0 0.0
    %131 = vmatprep.subr.mxu0 0.0
    %132 = vmatpush1.msra.mxu0 0.0
    %133 = vmatprep.subr.mxu0 0.0
    %134 = vmatpush1.msra.mxu0 0.0
    %135 = vmatprep.subr.mxu0 0.0
    %136 = vmatpush1.msra.mxu0 0.0
    %137 = vmatprep.subr.mxu0 0.0
    %138 = vmatpush1.msra.mxu0 0.0
    %139 = vmatprep.subr.mxu0 0.0
    %140 = vmatpush1.msra.mxu0 0.0
    %141 = vmatprep.subr.mxu0 0.0
    %142 = vmatpush1.msra.mxu0 0.0
    %143 = vmatprep.subr.mxu0 0.0
    %144 = vmatpush1.msra.mxu0 0.0
    %145 = vmatprep.subr.mxu0 0.0
    %146 = vmatpush1.msra.mxu0 0.0
    %147 = vmatprep.subr.mxu0 0.0
    %148 = vmatpush1.msra.mxu0 0.0
    %149 = vmatprep.subr.mxu0 0.0
    %150 = vmatpush1.msra.mxu0 0.0
    %151 = vmatprep.subr.mxu0 0.0
    %152 = vmatpush1.msra.mxu0 0.0
    %153 = vmatprep.subr.mxu0 0.0
    %154 = vmatpush1.msra.mxu0 0.0
    %155 = vmatprep.subr.mxu0 0.0
    %156 = vmatpush1.msra.mxu0 0.0
    %157 = vmatprep.subr.mxu0 0.0
    %158 = vmatpush1.msra.mxu0 0.0
    %159 = vmatprep.subr.mxu0 0.0
    %160 = vmatpush1.msra.mxu0 0.0
    %161 = vmatprep.subr.mxu0 0.0
    %162 = vmatpush1.msra.mxu0 0.0
    %163 = vmatprep.subr.mxu0 0.0
    %164 = vmatpush1.msra.mxu0 0.0
    %165 = vmatprep.subr.mxu0 0.0
    %166 = vmatpush1.msra.mxu0 0.0
    %167 = vmatprep.subr.mxu0 0.0
    %168 = vmatpush1.msra.mxu0 0.0
    %169 = vmatprep.subr.mxu0 0.0
    %170 = vmatpush1.msra.mxu0 0.0
    %171 = vmatprep.subr.mxu0 0.0
    %172 = vmatpush1.msra.mxu0 0.0
    %173 = vmatprep.mubr.f32.mxu0 0.0
    %174 = vmatmul.mubr.f32.gmra.mrb[0].mxu0 %v100
    %v175 = vpop.f32.mrb[0].mxu0
    %v176 = vadd.f32 0.0, %v175
    %v177 = vpop.f32.mrb[0].mxu0
    %178 = vmatprep.mubr.f32.mxu0 0.0
    %179 = vmatmul.mubr.f32.gmra.mrb[0].mxu0 %v103
    %v180 = vpop.f32.mrb[0].mxu0
    %v181 = vadd.f32 0.0, %v180
    %v182 = vpop.f32.mrb[0].mxu0
    %183 = vdwg.mxu0
    %vm184 = vcmask 785408
    %185 = vst.msk [vmem:[#allocation2] sm:$0xff] %vm184, %v176
    %186 = vst.msk [vmem:[#allocation2 + $0x8] sm:$0xff] %vm184, %v181
    // Predicated region
    $region14: #{tpu_custom_call.1} parent=1 // pred_check
      _
    $region15: #{tpu_custom_call.1} parent=1 // pred_check_branch
      %188 = sbr.rel (0) target = $region17
    $region16: #{tpu_custom_call.1} parent=1 // pred_region
      %s190 = ssub.s32 256, 256
      %191 = vsyncadd [#allocation3], %s190
      %s192 = sshll.u32 [#allocation2], 4
      %s193 = int_to_ptr.vmem [resolvable:$true] %s192
      %198 = dma.vmem_to_hbm [thread:$0]  %s193, 256, %s3, [#allocation3], 128, 128, 8
    $region17: #{tpu_custom_call.1} parent=1 // pred_fallthru
      _
    // Predicated region
    $region18: #{tpu_custom_call.1} parent=1 // pred_check
      _
    $region19: #{tpu_custom_call.1} parent=1 // pred_check_branch
      %200 = sbr.rel (0) target = $region21
    $region20: #{tpu_custom_call.1} parent=1 // pred_region
      %201 = dma.done [#allocation3], 256
    $region21: #{tpu_custom_call.1} parent=1 // pred_fallthru
      _
    %202 = vsyncpa [#allocation3], 1

</llo_original>
